<compile_context>
chip_gen: v7x
topology: tpu7x:2x2x1
jax: 0.10.0
libtpu: 0.0.40
codegen_flags: <defaults>
</compile_context>

<pallas_src>
import functools

import jax
import jax.numpy as jnp
from jax import lax
from jax.experimental import pallas as pl
from jax.experimental.pallas import tpu as pltpu


# ------------------------------ fused kernel -------------------------------

def _fused_inverted_residual_kernel(x_ref, we_ref, wd_ref, b2_ref, wp_ref,
                                    b3_ref, mask_ref, o_ref, *, W):
    """One lane-batched slab: expand -> depthwise -> project(+residual), all in VMEM.

    x_ref   : (1, P, Ms)   rows = [x (Cin), ones, zeros...];  Ms = ips * H * W (lane-dense)
    we_ref  : (hid, P)     bf16, 1x1 expand weight with BN1 scale folded, BN1 bias in col Cin
    wd_ref  : (9, hid, 1)  f32, per-tap per-channel depthwise weights, BN2 scale folded
    b2_ref  : (hid, 1)     BN2 bias
    wp_ref  : (P, hid)     bf16, 1x1 project weight (rows >= oup are zero), BN3 scale folded
    b3_ref  : (P, 1)       BN3 bias (rows >= oup are zero)
    mask_ref: (8, Ms)      f32 0/1 SAME-padding + image-seam masks for the 8 off-center taps
    o_ref   : (1, P, Ms)   rows >= oup are garbage and sliced off in the wrapper
    """
    x = x_ref[0]                                                   # (P, Ms) f32, residual source

    # ---- Stage 1: 1x1 expand + BN1 + ReLU6 (bf16 MXU operands, f32 accumulate) ----
    # BN1 bias is folded in via the ones row of x, so no separate bias add.
    h = jnp.dot(we_ref[...], x.astype(jnp.bfloat16),
                preferred_element_type=jnp.float32)                # (hid, Ms)
    h = jnp.clip(h, 0.0, 6.0)

    # ---- Stage 2: 3x3 depthwise, stride 1, SAME padding + BN2 + ReLU6 (f32 VPU/XLU) ----
    # Shifts over the flat spatial axis via XLU rolls; zero padding / image seams are
    # realized by the precomputed multiplicative masks.
    Ms = h.shape[1]
    wd = wd_ref[...]                                               # (9, hid, 1), loaded once
    masks = mask_ref[...]                                          # (8, Ms), loaded once
    acc = h * wd[4]                                                # center tap (dh=0, dw=0)
    j = 0
    for dh in (-1, 0, 1):
        for dw in (-1, 0, 1):
            if dh == 0 and dw == 0:
                continue
            k = (dh + 1) * 3 + (dw + 1)
            shift = dh * W + dw
            # shifted[c, m] = h[c, m + shift]
            shifted = pltpu.roll(h, (-shift) % Ms, axis=1)
            acc = acc + (shifted * wd[k]) * masks[j:j + 1, :]
            j += 1
    h = jnp.clip(acc + b2_ref[...], 0.0, 6.0)                      # (hid, Ms)

    # ---- Stage 3: 1x1 project + BN3 + residual (bf16 MXU operands, f32 accumulate) ----
    y = jnp.dot(wp_ref[...], h.astype(jnp.bfloat16),
                preferred_element_type=jnp.float32)                # (P, Ms)
    o_ref[0] = (y + b3_ref[...] + x).astype(o_ref.dtype)


# ------------------------------ JAX wrappers -------------------------------

def _bn_fold(gamma, beta, mean, var, eps=1e-5):
    scale = gamma * lax.rsqrt(var + eps)
    bias = beta - mean * scale
    return scale.astype(jnp.float32), bias.astype(jnp.float32)


def _round_up(v, m):
    return -(-v // m) * m


def inverted_residual_forward(x_nchw, params, *, images_per_step=None):
    """Forward matching InvertedResidual(inp, oup, stride=1, expand_ratio=6), inp == oup."""
    N, Cin, H, W = x_nchw.shape
    hid = params["w_expand"].shape[0]
    oup = params["w_project"].shape[0]
    assert oup == Cin, "use_res_connect path requires inp == oup"

    s1, b1 = _bn_fold(*params["bn1"])
    s2, b2 = _bn_fold(*params["bn2"])
    s3, b3 = _bn_fold(*params["bn3"])

    # Common padded channel count (sublane-full vregs for matmul LHS/outputs + bias row).
    P = _round_up(max(Cin + 1, oup), 8)

    # Fold BN scales into the conv weights; fold BN1 bias into the expand weight (ones row).
    we_f = params["w_expand"] * s1[:, None]                              # (hid, Cin)
    we_aug = jnp.zeros((hid, P), jnp.float32)
    we_aug = we_aug.at[:, :Cin].set(we_f).at[:, Cin].set(b1)
    we_aug = we_aug.astype(jnp.bfloat16)                                 # bf16 MXU operand

    wd_f = (params["w_dw"] * s2[:, None, None]).reshape(hid, 9)          # (hid, 9) row-major taps
    wd_split = jnp.transpose(wd_f).reshape(9, hid, 1)                    # tap-major, sublane cols

    wp_f = params["w_project"] * s3[:, None]                             # (oup, hid)
    wp_pad = jnp.zeros((P, hid), jnp.float32).at[:oup].set(wp_f).astype(jnp.bfloat16)
    b3_pad = jnp.zeros((P, 1), jnp.float32).at[:oup, 0].set(b3)

    # Images per grid step (batch folded into the lane axis).  Keep >= 2 grid steps whenever
    # N >= 2 so v7x can shard the grid across both TensorCores (no effect on v5e/v6e).
    if images_per_step is None:
        images_per_step = max(1, N // 2)
    while N % images_per_step:
        images_per_step -= 1
    G = N // images_per_step
    M_img = H * W
    Ms = images_per_step * M_img

    # Augmented, lane-batched input: channels = [x, ones (bias row), zero pad].
    x_flat = x_nchw.reshape(N, Cin, M_img).astype(jnp.float32)
    ones = jnp.ones((N, 1, M_img), jnp.float32)
    zeros = jnp.zeros((N, P - Cin - 1, M_img), jnp.float32)
    x_aug = jnp.concatenate([x_flat, ones, zeros], axis=1)               # (N, P, M_img)
    x_aug = x_aug.reshape(G, images_per_step, P, M_img)
    x_aug = jnp.transpose(x_aug, (0, 2, 1, 3)).reshape(G, P, Ms)

    # Precomputed SAME-padding / image-seam masks for the 8 off-center taps (hoisted out of
    # the kernel; constant index_map keeps them resident in VMEM across grid steps).
    m = jnp.arange(Ms, dtype=jnp.int32) % M_img
    row, col = m // W, m % W
    mask_rows = []
    for dh in (-1, 0, 1):
        for dw in (-1, 0, 1):
            if dh == 0 and dw == 0:
                continue
            ok = (row + dh >= 0) & (row + dh < H) & (col + dw >= 0) & (col + dw < W)
            mask_rows.append(ok)
    masks = jnp.stack(mask_rows).astype(jnp.float32)                     # (8, Ms)

    y = pl.pallas_call(
        functools.partial(_fused_inverted_residual_kernel, W=W),
        out_shape=jax.ShapeDtypeStruct((G, P, Ms), jnp.float32),
        grid=(G,),
        in_specs=[
            pl.BlockSpec((1, P, Ms), lambda n: (n, 0, 0)),     # x (also the residual)
            pl.BlockSpec((hid, P), lambda n: (0, 0)),          # folded expand weight (+b1 col)
            pl.BlockSpec((9, hid, 1), lambda n: (0, 0, 0)),    # depthwise taps, pre-split
            pl.BlockSpec((hid, 1), lambda n: (0, 0)),          # bn2 bias
            pl.BlockSpec((P, hid), lambda n: (0, 0)),          # folded project weight (padded)
            pl.BlockSpec((P, 1), lambda n: (0, 0)),            # bn3 bias (padded)
            pl.BlockSpec((8, Ms), lambda n: (0, 0)),           # boundary masks
        ],
        out_specs=pl.BlockSpec((1, P, Ms), lambda n: (n, 0, 0)),
        compiler_params=pltpu.CompilerParams(
            dimension_semantics=("parallel",)),
    )(x_aug, we_aug, wd_split, b2.reshape(hid, 1), wp_pad, b3_pad, masks)

    # Un-fold the lane-batched layout and drop the padded output channels.
    y = y.reshape(G, P, images_per_step, M_img)
    y = jnp.transpose(y, (0, 2, 1, 3)).reshape(N, P, H, W)
    return y[:, :oup]


# --------------------------- pure-JAX reference ----------------------------

def reference_forward(x_nchw, params):
    hid = params["w_expand"].shape[0]
    s1, b1 = _bn_fold(*params["bn1"])
    s2, b2 = _bn_fold(*params["bn2"])
    s3, b3 = _bn_fold(*params["bn3"])

    h = jnp.einsum("nchw,dc->ndhw", x_nchw, params["w_expand"])
    h = jnp.clip(h * s1[None, :, None, None] + b1[None, :, None, None], 0.0, 6.0)

    h = lax.conv_general_dilated(
        h, params["w_dw"].reshape(hid, 1, 3, 3), window_strides=(1, 1),
        padding="SAME", dimension_numbers=("NCHW", "OIHW", "NCHW"),
        feature_group_count=hid)
    h = jnp.clip(h * s2[None, :, None, None] + b2[None, :, None, None], 0.0, 6.0)

    y = jnp.einsum("nchw,dc->ndhw", h, params["w_project"])
    y = y * s3[None, :, None, None] + b3[None, :, None, None]
    return y + x_nchw


# ---------------------------------- main -----------------------------------

def make_params(key, inp, oup, expand_ratio):
    hid = round(inp * expand_ratio)
    ks = jax.random.split(key, 12)
    return {
        "w_expand": 0.2 * jax.random.normal(ks[0], (hid, inp), jnp.float32),
        "w_dw": 0.2 * jax.random.normal(ks[1], (hid, 3, 3), jnp.float32),
        "w_project": 0.2 * jax.random.normal(ks[2], (oup, hid), jnp.float32),
        "bn1": (1.0 + 0.1 * jax.random.normal(ks[3], (hid,), jnp.float32),
                0.1 * jax.random.normal(ks[4], (hid,), jnp.float32),
                0.1 * jax.random.normal(ks[5], (hid,), jnp.float32),
                1.0 + 0.1 * jax.random.uniform(ks[6], (hid,), jnp.float32)),
        "bn2": (1.0 + 0.1 * jax.random.normal(ks[7], (hid,), jnp.float32),
                0.1 * jax.random.normal(ks[8], (hid,), jnp.float32),
                0.1 * jax.random.normal(ks[9], (hid,), jnp.float32),
                1.0 + 0.1 * jax.random.uniform(ks[10], (hid,), jnp.float32)),
        "bn3": (jnp.ones((oup,), jnp.float32),
                jnp.zeros((oup,), jnp.float32),
                0.1 * jax.random.normal(ks[11], (oup,), jnp.float32),
                jnp.ones((oup,), jnp.float32)),
    }


if __name__ == "__main__":
    N, Cin, H, W = 2, 4, 16, 16
    oup, stride, expand_ratio = 4, 1, 6  # use_res_connect = True

    key = jax.random.PRNGKey(0)
    kx, kp = jax.random.split(key)
    x = jax.random.normal(kx, (N, Cin, H, W), jnp.float32)
    params = make_params(kp, Cin, oup, expand_ratio)

    fwd = jax.jit(inverted_residual_forward)
    out = jax.block_until_ready(fwd(x, params))
    ref = jax.block_until_ready(reference_forward(x, params))

    assert out.shape == (N, oup, H, W)
    # bf16 MXU operands -> tolerance relaxed vs the f32 reference (per review).
    assert jnp.allclose(out, ref, atol=5e-2, rtol=5e-2), \
        f"max abs err {jnp.max(jnp.abs(out - ref))}"

    print("KERNEL_OK")
</pallas_src>

<mosaic_0001>
module attributes {stable_mosaic.version = 11 : i64} {
  func.func @_fused_inverted_residual_kernel(%arg0: i32, %arg1: memref<1x8x256xf32, #tpu.memory_space<vmem>>, %arg2: memref<24x8xbf16, #tpu.memory_space<vmem>>, %arg3: memref<9x24x1xf32, #tpu.memory_space<vmem>>, %arg4: memref<24x1xf32, #tpu.memory_space<vmem>>, %arg5: memref<8x24xbf16, #tpu.memory_space<vmem>>, %arg6: memref<8x1xf32, #tpu.memory_space<vmem>>, %arg7: memref<8x256xf32, #tpu.memory_space<vmem>>, %arg8: memref<1x8x256xf32, #tpu.memory_space<vmem>>) attributes {dimension_semantics = [#tpu.dimension_semantics<parallel>], iteration_bounds = array<i64: 2>, scalar_prefetch = 0 : i64, scratch_operands = 0 : i64, tpu.core_type = #tpu.core_type<tc>, window_params = [{transform_indices = @transform_0, window_bounds = array<i64: 1, 8, 256>}, {pipeline_mode = #tpu.pipeline_mode<synchronous>, transform_indices = @transform_1, window_bounds = array<i64: 24, 8>}, {pipeline_mode = #tpu.pipeline_mode<synchronous>, transform_indices = @transform_2, window_bounds = array<i64: 9, 24, 1>}, {pipeline_mode = #tpu.pipeline_mode<synchronous>, transform_indices = @transform_3, window_bounds = array<i64: 24, 1>}, {pipeline_mode = #tpu.pipeline_mode<synchronous>, transform_indices = @transform_4, window_bounds = array<i64: 8, 24>}, {pipeline_mode = #tpu.pipeline_mode<synchronous>, transform_indices = @transform_5, window_bounds = array<i64: 8, 1>}, {pipeline_mode = #tpu.pipeline_mode<synchronous>, transform_indices = @transform_6, window_bounds = array<i64: 8, 256>}, {transform_indices = @transform_7, window_bounds = array<i64: 1, 8, 256>}]} {
    %c0 = arith.constant 0 : index
    %c0_0 = arith.constant 0 : index
    %c0_1 = arith.constant 0 : index
    %0 = vector.load %arg1[%c0, %c0_0, %c0_1] : memref<1x8x256xf32, #tpu.memory_space<vmem>>, vector<1x8x256xf32>
    %1 = vector.shape_cast %0 : vector<1x8x256xf32> to vector<8x256xf32>
    %c0_2 = arith.constant 0 : index
    %c0_3 = arith.constant 0 : index
    %2 = vector.load %arg2[%c0_2, %c0_3] : memref<24x8xbf16, #tpu.memory_space<vmem>>, vector<24x8xbf16>
    %3 = arith.truncf %1 : vector<8x256xf32> to vector<8x256xbf16>
    %cst = arith.constant dense<0.000000e+00> : vector<24x256xf32>
    %4 = tpu.matmul %2, %3, %cst {dimension_numbers = #tpu.dot_dimension_numbers<[1], [0], [0], [1], [0, 0, 1, 1], [], []>} : vector<24x8xbf16>, vector<8x256xbf16>, vector<24x256xf32> -> vector<24x256xf32>
    %cst_4 = arith.constant 0.000000e+00 : f32
    %cst_5 = arith.constant 6.000000e+00 : f32
    %5 = vector.broadcast %cst_4 : f32 to vector<24x256xf32>
    %6 = arith.maximumf %5, %4 : vector<24x256xf32>
    %7 = vector.broadcast %cst_5 : f32 to vector<24x256xf32>
    %8 = arith.minimumf %7, %6 : vector<24x256xf32>
    %c0_6 = arith.constant 0 : index
    %c0_7 = arith.constant 0 : index
    %c0_8 = arith.constant 0 : index
    %9 = vector.load %arg3[%c0_6, %c0_7, %c0_8] : memref<9x24x1xf32, #tpu.memory_space<vmem>>, vector<9x24x1xf32>
    %c0_9 = arith.constant 0 : index
    %c0_10 = arith.constant 0 : index
    %10 = vector.load %arg7[%c0_9, %c0_10] : memref<8x256xf32, #tpu.memory_space<vmem>>, vector<8x256xf32>
    %11 = vector.extract_strided_slice %9 {offsets = [4, 0, 0], sizes = [1, 24, 1], strides = [1, 1, 1]} : vector<9x24x1xf32> to vector<1x24x1xf32>
    %12 = vector.shape_cast %11 : vector<1x24x1xf32> to vector<24x1xf32>
    %13 = vector.broadcast %12 : vector<24x1xf32> to vector<24x256xf32>
    %14 = arith.mulf %8, %13 : vector<24x256xf32>
    %c17_i32 = arith.constant 17 : i32
    %15 = tpu.dynamic_rotate %8 by %c17_i32 dim 1 : vector<24x256xf32>, i32 -> vector<24x256xf32>
    %16 = vector.extract_strided_slice %9 {offsets = [0, 0, 0], sizes = [1, 24, 1], strides = [1, 1, 1]} : vector<9x24x1xf32> to vector<1x24x1xf32>
    %17 = vector.shape_cast %16 : vector<1x24x1xf32> to vector<24x1xf32>
    %18 = vector.broadcast %17 : vector<24x1xf32> to vector<24x256xf32>
    %19 = arith.mulf %15, %18 : vector<24x256xf32>
    %20 = vector.extract_strided_slice %10 {offsets = [0, 0], sizes = [1, 256], strides = [1, 1]} : vector<8x256xf32> to vector<1x256xf32>
    %21 = vector.broadcast %20 : vector<1x256xf32> to vector<24x256xf32>
    %22 = arith.mulf %19, %21 : vector<24x256xf32>
    %23 = arith.addf %14, %22 : vector<24x256xf32>
    %c16_i32 = arith.constant 16 : i32
    %24 = tpu.dynamic_rotate %8 by %c16_i32 dim 1 : vector<24x256xf32>, i32 -> vector<24x256xf32>
    %25 = vector.extract_strided_slice %9 {offsets = [1, 0, 0], sizes = [1, 24, 1], strides = [1, 1, 1]} : vector<9x24x1xf32> to vector<1x24x1xf32>
    %26 = vector.shape_cast %25 : vector<1x24x1xf32> to vector<24x1xf32>
    %27 = vector.broadcast %26 : vector<24x1xf32> to vector<24x256xf32>
    %28 = arith.mulf %24, %27 : vector<24x256xf32>
    %29 = vector.extract_strided_slice %10 {offsets = [1, 0], sizes = [1, 256], strides = [1, 1]} : vector<8x256xf32> to vector<1x256xf32>
    %30 = vector.broadcast %29 : vector<1x256xf32> to vector<24x256xf32>
    %31 = arith.mulf %28, %30 : vector<24x256xf32>
    %32 = arith.addf %23, %31 : vector<24x256xf32>
    %c15_i32 = arith.constant 15 : i32
    %33 = tpu.dynamic_rotate %8 by %c15_i32 dim 1 : vector<24x256xf32>, i32 -> vector<24x256xf32>
    %34 = vector.extract_strided_slice %9 {offsets = [2, 0, 0], sizes = [1, 24, 1], strides = [1, 1, 1]} : vector<9x24x1xf32> to vector<1x24x1xf32>
    %35 = vector.shape_cast %34 : vector<1x24x1xf32> to vector<24x1xf32>
    %36 = vector.broadcast %35 : vector<24x1xf32> to vector<24x256xf32>
    %37 = arith.mulf %33, %36 : vector<24x256xf32>
    %38 = vector.extract_strided_slice %10 {offsets = [2, 0], sizes = [1, 256], strides = [1, 1]} : vector<8x256xf32> to vector<1x256xf32>
    %39 = vector.broadcast %38 : vector<1x256xf32> to vector<24x256xf32>
    %40 = arith.mulf %37, %39 : vector<24x256xf32>
    %41 = arith.addf %32, %40 : vector<24x256xf32>
    %c1_i32 = arith.constant 1 : i32
    %42 = tpu.dynamic_rotate %8 by %c1_i32 dim 1 : vector<24x256xf32>, i32 -> vector<24x256xf32>
    %43 = vector.extract_strided_slice %9 {offsets = [3, 0, 0], sizes = [1, 24, 1], strides = [1, 1, 1]} : vector<9x24x1xf32> to vector<1x24x1xf32>
    %44 = vector.shape_cast %43 : vector<1x24x1xf32> to vector<24x1xf32>
    %45 = vector.broadcast %44 : vector<24x1xf32> to vector<24x256xf32>
    %46 = arith.mulf %42, %45 : vector<24x256xf32>
    %47 = vector.extract_strided_slice %10 {offsets = [3, 0], sizes = [1, 256], strides = [1, 1]} : vector<8x256xf32> to vector<1x256xf32>
    %48 = vector.broadcast %47 : vector<1x256xf32> to vector<24x256xf32>
    %49 = arith.mulf %46, %48 : vector<24x256xf32>
    %50 = arith.addf %41, %49 : vector<24x256xf32>
    %c255_i32 = arith.constant 255 : i32
    %51 = tpu.dynamic_rotate %8 by %c255_i32 dim 1 : vector<24x256xf32>, i32 -> vector<24x256xf32>
    %52 = vector.extract_strided_slice %9 {offsets = [5, 0, 0], sizes = [1, 24, 1], strides = [1, 1, 1]} : vector<9x24x1xf32> to vector<1x24x1xf32>
    %53 = vector.shape_cast %52 : vector<1x24x1xf32> to vector<24x1xf32>
    %54 = vector.broadcast %53 : vector<24x1xf32> to vector<24x256xf32>
    %55 = arith.mulf %51, %54 : vector<24x256xf32>
    %56 = vector.extract_strided_slice %10 {offsets = [4, 0], sizes = [1, 256], strides = [1, 1]} : vector<8x256xf32> to vector<1x256xf32>
    %57 = vector.broadcast %56 : vector<1x256xf32> to vector<24x256xf32>
    %58 = arith.mulf %55, %57 : vector<24x256xf32>
    %59 = arith.addf %50, %58 : vector<24x256xf32>
    %c241_i32 = arith.constant 241 : i32
    %60 = tpu.dynamic_rotate %8 by %c241_i32 dim 1 : vector<24x256xf32>, i32 -> vector<24x256xf32>
    %61 = vector.extract_strided_slice %9 {offsets = [6, 0, 0], sizes = [1, 24, 1], strides = [1, 1, 1]} : vector<9x24x1xf32> to vector<1x24x1xf32>
    %62 = vector.shape_cast %61 : vector<1x24x1xf32> to vector<24x1xf32>
    %63 = vector.broadcast %62 : vector<24x1xf32> to vector<24x256xf32>
    %64 = arith.mulf %60, %63 : vector<24x256xf32>
    %65 = vector.extract_strided_slice %10 {offsets = [5, 0], sizes = [1, 256], strides = [1, 1]} : vector<8x256xf32> to vector<1x256xf32>
    %66 = vector.broadcast %65 : vector<1x256xf32> to vector<24x256xf32>
    %67 = arith.mulf %64, %66 : vector<24x256xf32>
    %68 = arith.addf %59, %67 : vector<24x256xf32>
    %c240_i32 = arith.constant 240 : i32
    %69 = tpu.dynamic_rotate %8 by %c240_i32 dim 1 : vector<24x256xf32>, i32 -> vector<24x256xf32>
    %70 = vector.extract_strided_slice %9 {offsets = [7, 0, 0], sizes = [1, 24, 1], strides = [1, 1, 1]} : vector<9x24x1xf32> to vector<1x24x1xf32>
    %71 = vector.shape_cast %70 : vector<1x24x1xf32> to vector<24x1xf32>
    %72 = vector.broadcast %71 : vector<24x1xf32> to vector<24x256xf32>
    %73 = arith.mulf %69, %72 : vector<24x256xf32>
    %74 = vector.extract_strided_slice %10 {offsets = [6, 0], sizes = [1, 256], strides = [1, 1]} : vector<8x256xf32> to vector<1x256xf32>
    %75 = vector.broadcast %74 : vector<1x256xf32> to vector<24x256xf32>
    %76 = arith.mulf %73, %75 : vector<24x256xf32>
    %77 = arith.addf %68, %76 : vector<24x256xf32>
    %c239_i32 = arith.constant 239 : i32
    %78 = tpu.dynamic_rotate %8 by %c239_i32 dim 1 : vector<24x256xf32>, i32 -> vector<24x256xf32>
    %79 = vector.extract_strided_slice %9 {offsets = [8, 0, 0], sizes = [1, 24, 1], strides = [1, 1, 1]} : vector<9x24x1xf32> to vector<1x24x1xf32>
    %80 = vector.shape_cast %79 : vector<1x24x1xf32> to vector<24x1xf32>
    %81 = vector.broadcast %80 : vector<24x1xf32> to vector<24x256xf32>
    %82 = arith.mulf %78, %81 : vector<24x256xf32>
    %83 = vector.extract_strided_slice %10 {offsets = [7, 0], sizes = [1, 256], strides = [1, 1]} : vector<8x256xf32> to vector<1x256xf32>
    %84 = vector.broadcast %83 : vector<1x256xf32> to vector<24x256xf32>
    %85 = arith.mulf %82, %84 : vector<24x256xf32>
    %86 = arith.addf %77, %85 : vector<24x256xf32>
    %c0_11 = arith.constant 0 : index
    %c0_12 = arith.constant 0 : index
    %87 = vector.load %arg4[%c0_11, %c0_12] : memref<24x1xf32, #tpu.memory_space<vmem>>, vector<24x1xf32>
    %88 = vector.broadcast %87 : vector<24x1xf32> to vector<24x256xf32>
    %89 = arith.addf %86, %88 : vector<24x256xf32>
    %cst_13 = arith.constant 0.000000e+00 : f32
    %cst_14 = arith.constant 6.000000e+00 : f32
    %90 = vector.broadcast %cst_13 : f32 to vector<24x256xf32>
    %91 = arith.maximumf %90, %89 : vector<24x256xf32>
    %92 = vector.broadcast %cst_14 : f32 to vector<24x256xf32>
    %93 = arith.minimumf %92, %91 : vector<24x256xf32>
    %c0_15 = arith.constant 0 : index
    %c0_16 = arith.constant 0 : index
    %94 = vector.load %arg5[%c0_15, %c0_16] : memref<8x24xbf16, #tpu.memory_space<vmem>>, vector<8x24xbf16>
    %95 = arith.truncf %93 : vector<24x256xf32> to vector<24x256xbf16>
    %cst_17 = arith.constant dense<0.000000e+00> : vector<8x256xf32>
    %96 = tpu.matmul %94, %95, %cst_17 {dimension_numbers = #tpu.dot_dimension_numbers<[1], [0], [0], [1], [0, 0, 1, 1], [], []>} : vector<8x24xbf16>, vector<24x256xbf16>, vector<8x256xf32> -> vector<8x256xf32>
    %c0_18 = arith.constant 0 : index
    %c0_19 = arith.constant 0 : index
    %97 = vector.load %arg6[%c0_18, %c0_19] : memref<8x1xf32, #tpu.memory_space<vmem>>, vector<8x1xf32>
    %98 = vector.broadcast %97 : vector<8x1xf32> to vector<8x256xf32>
    %99 = arith.addf %96, %98 : vector<8x256xf32>
    %100 = arith.addf %99, %1 : vector<8x256xf32>
    %c0_20 = arith.constant 0 : index
    %c0_21 = arith.constant 0 : index
    %c0_22 = arith.constant 0 : index
    %101 = vector.load %arg8[%c0_20, %c0_21, %c0_22] : memref<1x8x256xf32, #tpu.memory_space<vmem>>, vector<1x8x256xf32>
    %102 = vector.shape_cast %101 : vector<1x8x256xf32> to vector<8x256xf32>
    %103 = vector.shape_cast %100 : vector<8x256xf32> to vector<1x8x256xf32>
    tpu.vector_store %arg8[%c0_20, %c0_21, %c0_22], %103 {strides = array<i32>} : memref<1x8x256xf32, #tpu.memory_space<vmem>>, vector<1x8x256xf32>,
    return
  }
  func.func @transform_0(%arg0: i32) -> (i32, i32, i32) {
    %c0_i32 = arith.constant 0 : i32
    %c0_i32_0 = arith.constant 0 : i32
    %c0_i32_1 = arith.constant 0 : i32
    return %arg0, %c0_i32, %c0_i32_0 : i32, i32, i32
  }
  func.func @transform_1(%arg0: i32) -> (i32, i32) {
    %c0_i32 = arith.constant 0 : i32
    %c0_i32_0 = arith.constant 0 : i32
    %c0_i32_1 = arith.constant 0 : i32
    return %c0_i32, %c0_i32_0 : i32, i32
  }
  func.func @transform_2(%arg0: i32) -> (i32, i32, i32) {
    %c0_i32 = arith.constant 0 : i32
    %c0_i32_0 = arith.constant 0 : i32
    %c0_i32_1 = arith.constant 0 : i32
    %c0_i32_2 = arith.constant 0 : i32
    return %c0_i32, %c0_i32_0, %c0_i32_1 : i32, i32, i32
  }
  func.func @transform_3(%arg0: i32) -> (i32, i32) {
    %c0_i32 = arith.constant 0 : i32
    %c0_i32_0 = arith.constant 0 : i32
    %c0_i32_1 = arith.constant 0 : i32
    return %c0_i32, %c0_i32_0 : i32, i32
  }
  func.func @transform_4(%arg0: i32) -> (i32, i32) {
    %c0_i32 = arith.constant 0 : i32
    %c0_i32_0 = arith.constant 0 : i32
    %c0_i32_1 = arith.constant 0 : i32
    return %c0_i32, %c0_i32_0 : i32, i32
  }
  func.func @transform_5(%arg0: i32) -> (i32, i32) {
    %c0_i32 = arith.constant 0 : i32
    %c0_i32_0 = arith.constant 0 : i32
    %c0_i32_1 = arith.constant 0 : i32
    return %c0_i32, %c0_i32_0 : i32, i32
  }
  func.func @transform_6(%arg0: i32) -> (i32, i32) {
    %c0_i32 = arith.constant 0 : i32
    %c0_i32_0 = arith.constant 0 : i32
    %c0_i32_1 = arith.constant 0 : i32
    return %c0_i32, %c0_i32_0 : i32, i32
  }
  func.func @transform_7(%arg0: i32) -> (i32, i32, i32) {
    %c0_i32 = arith.constant 0 : i32
    %c0_i32_0 = arith.constant 0 : i32
    %c0_i32_1 = arith.constant 0 : i32
    return %arg0, %c0_i32, %c0_i32_0 : i32, i32, i32
  }
}

</mosaic_0001>

<llo_original>
// kernel: inverted_residual_forward.1
$region0: #{inverted_residual_forward.1}
  #allocation0 [shape = 'u32[]', space=smem, size = 0x4, offset = 0x4, fixed_abs, tag = 'smem constant byte address 0x4 - core index']
  #allocation1 [shape = 'u32[144,128]{1,0:T(1,128)}', space=vmem, size = 0x12000, scoped, tag = 'internal scratch']
  %s0 = inlined_call_operand.vmem [shape: f32[2,8,256], index: 0, kind: input, shape index: {}]
  %s1 = inlined_call_operand.vmem [shape: bf16[24,8], index: 1, kind: input, shape index: {}]
  %s2 = inlined_call_operand.vmem [shape: f32[9,24,1], index: 2, kind: input, shape index: {}]
  %s3 = inlined_call_operand.vmem [shape: f32[24,1], index: 3, kind: input, shape index: {}]
  %s4 = inlined_call_operand.vmem [shape: bf16[8,24], index: 4, kind: input, shape index: {}]
  %s5 = inlined_call_operand.vmem [shape: f32[8,1], index: 5, kind: input, shape index: {}]
  %s6 = inlined_call_operand.vmem [shape: f32[8,256], index: 6, kind: input, shape index: {}]
  %s7 = inlined_call_operand.vmem [shape: f32[2,8,256], index: 7, kind: output, shape index: {}]
  %s8 = sld [smem:[#allocation0]]
  $region61: #{inverted_residual_forward.1} parent=0
    _
  %s10 = ssub.s32 1, %s8
  %s11 = scalar_select 0, %s10, %s8
  loop: start=0, step=1, limit=4
  $region2: #{inverted_residual_forward.1} parent=0 // loop_pre_header
    _
  $region3: #{inverted_residual_forward.1} parent=0 // loop_header
    %s13 = sphi 0, %s17
    %p14 = scmp.ge.s32.totalorder %s13, 4
    %s23 = sphi 0, %s25
    %s26 = sphi 0, %s23
    %s27 = sphi 0, %s26
    %s43 = sphi 0, %s27
    %s47 = sphi 0, %s47
    %s49 = sphi 0, %s47
    %s50 = sphi 0, %s49
    %s64 = sphi 0, %s50
    %s68 = sphi 0, %s68
    %s70 = sphi 0, %s68
    %s71 = sphi 0, %s70
    %s85 = sphi 0, %s71
    %s89 = sphi 0, %s89
    %s91 = sphi 0, %s89
    %s92 = sphi 0, %s91
    %s106 = sphi 0, %s92
    %s110 = sphi 0, %s110
    %s112 = sphi 0, %s110
    %s113 = sphi 0, %s112
    %s127 = sphi 0, %s113
    %s131 = sphi 0, %s131
    %s133 = sphi 0, %s131
    %s134 = sphi 0, %s133
    %s148 = sphi 0, %s134
    %s152 = sphi 0, %s152
    %s154 = sphi 0, %s152
    %s155 = sphi 0, %s154
    %s169 = sphi 0, %s155
    %s175 = sphi 0, %s177
    %s178 = sphi 0, %s175
    %s179 = sphi 0, %s178
    %s195 = sphi 0, %s179
  $region4: #{inverted_residual_forward.1} parent=0 // loop_header_branch
    %16 = sbr.rel (%p14) target = $region8
  $region5: #{inverted_residual_forward.1} parent=0 // loop_body
    %s18 = ssub.s32 %s13, 1
    %s19 = ssub.s32 %s13, 2
    %s20 = sadd.s32 %s13, 1
    %s21 = ssub.s32 %s13, %s20
    %p22 = scmp.eq.s32.totalorder %s21, 0
    %s24 = sadd.s32 %s23, 1
    %s25 = scalar_select %p22, %s23, %s24
    %p28 = pneg %p22
    %p29 = scmp.eq.s32.totalorder %s13, 1
    %p30 = por %p28, %p29
    %p31 = scmp.ne.s32.totalorder %s23, %s26
    %p32 = scmp.eq.s32.totalorder %s13, 0
    %p33 = por %p31, %p32
    %p34 = scmp.ne.s32.totalorder %s23, %s26
    %p35 = scmp.eq.s32.totalorder %s18, 1
    %p36 = por %p34, %p35
    %p37 = scmp.ne.s32.totalorder %s26, %s27
    %p38 = scmp.eq.s32.totalorder %s18, 0
    %p39 = por %p37, %p38
    %p40 = scmp.ne.s32.totalorder %s26, %s27
    %p41 = scmp.eq.s32.totalorder %s19, 1
    %p42 = por %p40, %p41
    %p44 = scmp.ne.s32.totalorder %s27, %s43
    %p45 = scmp.eq.s32.totalorder %s19, 0
    %p46 = por %p44, %p45
    %s48 = sadd.s32 %s47, 1
    %p51 = scmp.eq.s32.totalorder %s13, 1
    %p52 = scmp.ne.s32.totalorder %s47, %s49
    %p53 = scmp.eq.s32.totalorder %s13, 0
    %p54 = por %p52, %p53
    %p55 = scmp.ne.s32.totalorder %s47, %s49
    %p56 = scmp.eq.s32.totalorder %s18, 1
    %p57 = por %p55, %p56
    %p58 = scmp.ne.s32.totalorder %s49, %s50
    %p59 = scmp.eq.s32.totalorder %s18, 0
    %p60 = por %p58, %p59
    %p61 = scmp.ne.s32.totalorder %s49, %s50
    %p62 = scmp.eq.s32.totalorder %s19, 1
    %p63 = por %p61, %p62
    %p65 = scmp.ne.s32.totalorder %s50, %s64
    %p66 = scmp.eq.s32.totalorder %s19, 0
    %p67 = por %p65, %p66
    %s69 = sadd.s32 %s68, 1
    %p72 = scmp.eq.s32.totalorder %s13, 1
    %p73 = scmp.ne.s32.totalorder %s68, %s70
    %p74 = scmp.eq.s32.totalorder %s13, 0
    %p75 = por %p73, %p74
    %p76 = scmp.ne.s32.totalorder %s68, %s70
    %p77 = scmp.eq.s32.totalorder %s18, 1
    %p78 = por %p76, %p77
    %p79 = scmp.ne.s32.totalorder %s70, %s71
    %p80 = scmp.eq.s32.totalorder %s18, 0
    %p81 = por %p79, %p80
    %p82 = scmp.ne.s32.totalorder %s70, %s71
    %p83 = scmp.eq.s32.totalorder %s19, 1
    %p84 = por %p82, %p83
    %p86 = scmp.ne.s32.totalorder %s71, %s85
    %p87 = scmp.eq.s32.totalorder %s19, 0
    %p88 = por %p86, %p87
    %s90 = sadd.s32 %s89, 1
    %p93 = scmp.eq.s32.totalorder %s13, 1
    %p94 = scmp.ne.s32.totalorder %s89, %s91
    %p95 = scmp.eq.s32.totalorder %s13, 0
    %p96 = por %p94, %p95
    %p97 = scmp.ne.s32.totalorder %s89, %s91
    %p98 = scmp.eq.s32.totalorder %s18, 1
    %p99 = por %p97, %p98
    %p100 = scmp.ne.s32.totalorder %s91, %s92
    %p101 = scmp.eq.s32.totalorder %s18, 0
    %p102 = por %p100, %p101
    %p103 = scmp.ne.s32.totalorder %s91, %s92
    %p104 = scmp.eq.s32.totalorder %s19, 1
    %p105 = por %p103, %p104
    %p107 = scmp.ne.s32.totalorder %s92, %s106
    %p108 = scmp.eq.s32.totalorder %s19, 0
    %p109 = por %p107, %p108
    %s111 = sadd.s32 %s110, 1
    %p114 = scmp.eq.s32.totalorder %s13, 1
    %p115 = scmp.ne.s32.totalorder %s110, %s112
    %p116 = scmp.eq.s32.totalorder %s13, 0
    %p117 = por %p115, %p116
    %p118 = scmp.ne.s32.totalorder %s110, %s112
    %p119 = scmp.eq.s32.totalorder %s18, 1
    %p120 = por %p118, %p119
    %p121 = scmp.ne.s32.totalorder %s112, %s113
    %p122 = scmp.eq.s32.totalorder %s18, 0
    %p123 = por %p121, %p122
    %p124 = scmp.ne.s32.totalorder %s112, %s113
    %p125 = scmp.eq.s32.totalorder %s19, 1
    %p126 = por %p124, %p125
    %p128 = scmp.ne.s32.totalorder %s113, %s127
    %p129 = scmp.eq.s32.totalorder %s19, 0
    %p130 = por %p128, %p129
    %s132 = sadd.s32 %s131, 1
    %p135 = scmp.eq.s32.totalorder %s13, 1
    %p136 = scmp.ne.s32.totalorder %s131, %s133
    %p137 = scmp.eq.s32.totalorder %s13, 0
    %p138 = por %p136, %p137
    %p139 = scmp.ne.s32.totalorder %s131, %s133
    %p140 = scmp.eq.s32.totalorder %s18, 1
    %p141 = por %p139, %p140
    %p142 = scmp.ne.s32.totalorder %s133, %s134
    %p143 = scmp.eq.s32.totalorder %s18, 0
    %p144 = por %p142, %p143
    %p145 = scmp.ne.s32.totalorder %s133, %s134
    %p146 = scmp.eq.s32.totalorder %s19, 1
    %p147 = por %p145, %p146
    %p149 = scmp.ne.s32.totalorder %s134, %s148
    %p150 = scmp.eq.s32.totalorder %s19, 0
    %p151 = por %p149, %p150
    %s153 = sadd.s32 %s152, 1
    %p156 = scmp.eq.s32.totalorder %s13, 1
    %p157 = scmp.ne.s32.totalorder %s152, %s154
    %p158 = scmp.eq.s32.totalorder %s13, 0
    %p159 = por %p157, %p158
    %p160 = scmp.ne.s32.totalorder %s152, %s154
    %p161 = scmp.eq.s32.totalorder %s18, 1
    %p162 = por %p160, %p161
    %p163 = scmp.ne.s32.totalorder %s154, %s155
    %p164 = scmp.eq.s32.totalorder %s18, 0
    %p165 = por %p163, %p164
    %p166 = scmp.ne.s32.totalorder %s154, %s155
    %p167 = scmp.eq.s32.totalorder %s19, 1
    %p168 = por %p166, %p167
    %p170 = scmp.ne.s32.totalorder %s155, %s169
    %p171 = scmp.eq.s32.totalorder %s19, 0
    %p172 = por %p170, %p171
    %s173 = ssub.s32 %s13, %s20
    %p174 = scmp.eq.s32.totalorder %s173, 0
    %s176 = sadd.s32 %s175, 1
    %s177 = scalar_select %p174, %s175, %s176
    %p180 = pneg %p174
    %p181 = scmp.eq.s32.totalorder %s13, 1
    %p182 = por %p180, %p181
    %p183 = scmp.ne.s32.totalorder %s175, %s178
    %p184 = scmp.eq.s32.totalorder %s13, 0
    %p185 = por %p183, %p184
    %p186 = scmp.ne.s32.totalorder %s175, %s178
    %p187 = scmp.eq.s32.totalorder %s18, 1
    %p188 = por %p186, %p187
    %p189 = scmp.ne.s32.totalorder %s178, %s179
    %p190 = scmp.eq.s32.totalorder %s18, 0
    %p191 = por %p189, %p190
    %p192 = scmp.ne.s32.totalorder %s178, %s179
    %p193 = scmp.eq.s32.totalorder %s19, 1
    %p194 = por %p192, %p193
    %p196 = scmp.ne.s32.totalorder %s179, %s195
    %p197 = scmp.eq.s32.totalorder %s19, 0
    %p198 = por %p196, %p197
    %p199 = scmp.le.s32.totalorder 1, %s13
    %p200 = scmp.lt.s32.totalorder %s13, 3
    %p201 = pnand %p199, %p200
    %p202 = pneg %p201
    // Predicated region
    $region9: #{inverted_residual_forward.1} parent=5 // pred_check
      _
    $region10: #{inverted_residual_forward.1} parent=5 // pred_check_branch
      %204 = sbr.rel (%p201) target = $region12
    $region11: #{inverted_residual_forward.1} parent=5 // pred_region
      %s205 = ssub.s32 %s13, 1
      // Predicated region
      $region13: #{inverted_residual_forward.1} parent=11 // pred_check
        %p206 = pneg %p60
      $region14: #{inverted_residual_forward.1} parent=11 // pred_check_branch
        %208 = sbr.rel (%p206) target = $region16
      $region15: #{inverted_residual_forward.1} parent=11 // pred_region
        _
      $region16: #{inverted_residual_forward.1} parent=11 // pred_fallthru
        _
      // Predicated region
      $region17: #{inverted_residual_forward.1} parent=11 // pred_check
        %p209 = pneg %p81
      $region18: #{inverted_residual_forward.1} parent=11 // pred_check_branch
        %211 = sbr.rel (%p209) target = $region20
      $region19: #{inverted_residual_forward.1} parent=11 // pred_region
        _
      $region20: #{inverted_residual_forward.1} parent=11 // pred_fallthru
        _
      // Predicated region
      $region21: #{inverted_residual_forward.1} parent=11 // pred_check
        %p212 = pneg %p102
      $region22: #{inverted_residual_forward.1} parent=11 // pred_check_branch
        %214 = sbr.rel (%p212) target = $region24
      $region23: #{inverted_residual_forward.1} parent=11 // pred_region
        _
      $region24: #{inverted_residual_forward.1} parent=11 // pred_fallthru
        _
      // Predicated region
      $region25: #{inverted_residual_forward.1} parent=11 // pred_check
        %p215 = pneg %p123
      $region26: #{inverted_residual_forward.1} parent=11 // pred_check_branch
        %217 = sbr.rel (%p215) target = $region28
      $region27: #{inverted_residual_forward.1} parent=11 // pred_region
        _
      $region28: #{inverted_residual_forward.1} parent=11 // pred_fallthru
        _
      // Predicated region
      $region29: #{inverted_residual_forward.1} parent=11 // pred_check
        %p218 = pneg %p144
      $region30: #{inverted_residual_forward.1} parent=11 // pred_check_branch
        %220 = sbr.rel (%p218) target = $region32
      $region31: #{inverted_residual_forward.1} parent=11 // pred_region
        _
      $region32: #{inverted_residual_forward.1} parent=11 // pred_fallthru
        _
      // Predicated region
      $region33: #{inverted_residual_forward.1} parent=11 // pred_check
        %p221 = pneg %p165
      $region34: #{inverted_residual_forward.1} parent=11 // pred_check_branch
        %223 = sbr.rel (%p221) target = $region36
      $region35: #{inverted_residual_forward.1} parent=11 // pred_region
        _
      $region36: #{inverted_residual_forward.1} parent=11 // pred_fallthru
        _
    $region12: #{inverted_residual_forward.1} parent=5 // pred_fallthru
      _
    %p224 = scmp.lt.s32.totalorder %s13, 2
    // Predicated region
    $region37: #{inverted_residual_forward.1} parent=5 // pred_check
      %p225 = pneg %p224
    $region38: #{inverted_residual_forward.1} parent=5 // pred_check_branch
      %227 = sbr.rel (%p225) target = $region40
    $region39: #{inverted_residual_forward.1} parent=5 // pred_region
      // Predicated region
      $region41: #{inverted_residual_forward.1} parent=39 // pred_check
        %p228 = pneg %p33
      $region42: #{inverted_residual_forward.1} parent=39 // pred_check_branch
        %230 = sbr.rel (%p228) target = $region44
      $region43: #{inverted_residual_forward.1} parent=39 // pred_region
        %p231 = scmp.lt.s32.totalorder %s13, 1
        %s232 = scalar_select %p231, %s13, 1
        %s233 = smul.addr %s232, 2
        %s234 = smul.addr %s233, 8
        %s235 = scalar_lea.vmem %s0, %s234
      $region44: #{inverted_residual_forward.1} parent=39 // pred_fallthru
        _
    $region40: #{inverted_residual_forward.1} parent=5 // pred_fallthru
      _
    %p236 = scmp.le.s32.totalorder 1, %s13
    %p237 = scmp.lt.s32.totalorder %s13, 3
    %p238 = pnand %p236, %p237
    %p239 = pneg %p238
    // Predicated region
    $region45: #{inverted_residual_forward.1} parent=5 // pred_check
      _
    $region46: #{inverted_residual_forward.1} parent=5 // pred_check_branch
      %241 = sbr.rel (%p238) target = $region48
    $region47: #{inverted_residual_forward.1} parent=5 // pred_region
      %s242 = ssub.s32 %s13, 1
      %p243 = scmp.lt.s32.totalorder %s18, 1
      %s244 = scalar_select %p243, %s18, 1
      %s245 = smul.addr %s244, 2
      %s246 = smul.addr %s245, 8
      %s247 = scalar_lea.vmem %s0, %s246
      %p248 = pneg %p39
      %p249 = pneg %p36
      %p250 = pneg %p60
      %p251 = pneg %p57
      %p252 = pneg %p81
      %p253 = pneg %p78
      %p254 = pneg %p102
      %p255 = pneg %p99
      %p256 = pneg %p123
      %p257 = pneg %p120
      %p258 = pneg %p144
      %p259 = pneg %p141
      %p260 = pneg %p165
      %p261 = pneg %p162
      %p262 = pneg %p191
      %p263 = pneg %p188
      %p264 = scmp.lt.s32.totalorder %s18, 1
      %s265 = scalar_select %p264, %s18, 1
      %s266 = smul.addr %s265, 2
      %s267 = smul.addr %s266, 8
      %s268 = scalar_lea.vmem %s7, %s267
      %p269 = scmp.lt.s32.totalorder %s18, 1
      %s270 = scalar_select %p269, %s18, 1
      %s271 = smul.addr %s270, 2
      %s272 = smul.addr %s271, 8
      %s273 = scalar_lea.vmem %s0, %s272
      %p274 = scmp.lt.s32.totalorder %s18, 1
      %s275 = scalar_select %p274, %s18, 1
      %s276 = smul.addr %s275, 2
      %s277 = smul.addr %s276, 8
      %s278 = scalar_lea.vmem %s7, %s277
      %v280 = vld [vmem:[%s273] sm:$0xff]
      %v281 = vld [vmem:[%s273 + $0x8] sm:$0xff]
      %v282 = vld [vmem:[%s1] sm:$0xf]
      %v283 = vld [vmem:[%s1 + $0x4] sm:$0xf]
      %v284 = vld [vmem:[%s1 + $0x8] sm:$0xf]
      %v285 = vpack.c.bf16 %v280, %v280
      %v286 = vpack.c.bf16 %v281, %v281
      %v290 = vunpack.c.l.b16 %v282
      %v291 = vunpack.c.l.b16 %v283
      %v292 = vunpack.c.l.b16 %v284
      %v293 = vpack.c.b16 %v291, %v290
      %v294 = vpack.c.b16 %v292, %v292
      %vm295 = vcmask 64512
      %v297 = vsel %vm295, %v293, 0
      %v300 = vsel %vm295, %v294, 0
      %vm302 = vcmask 1043456
      %v304 = vsel %vm302, %v285, 0
      %v307 = vsel %vm302, %v286, 0
      %309 = vmatprep.subr.bf16.mxu0 %v307
      %310 = vmatpush1.bf16.msra.mxu0 %v304
      %311 = vmatprep.subr.bf16.mxu0 0
      %312 = vmatpush1.bf16.msra.mxu0 0
      %313 = vmatprep.subr.bf16.mxu0 0
      %314 = vmatpush1.bf16.msra.mxu0 0
      %315 = vmatprep.subr.bf16.mxu0 0
      %316 = vmatpush1.bf16.msra.mxu0 0
      %317 = vmatprep.subr.bf16.mxu0 0
      %318 = vmatpush1.bf16.msra.mxu0 0
      %319 = vmatprep.subr.bf16.mxu0 0
      %320 = vmatpush1.bf16.msra.mxu0 0
      %321 = vmatprep.subr.bf16.mxu0 0
      %322 = vmatpush1.bf16.msra.mxu0 0
      %323 = vmatprep.subr.bf16.mxu0 0
      %324 = vmatpush1.bf16.msra.mxu0 0
      %325 = vmatprep.subr.bf16.mxu0 0
      %326 = vmatpush1.bf16.msra.mxu0 0
      %327 = vmatprep.subr.bf16.mxu0 0
      %328 = vmatpush1.bf16.msra.mxu0 0
      %329 = vmatprep.subr.bf16.mxu0 0
      %330 = vmatpush1.bf16.msra.mxu0 0
      %331 = vmatprep.subr.bf16.mxu0 0
      %332 = vmatpush1.bf16.msra.mxu0 0
      %333 = vmatprep.subr.bf16.mxu0 0
      %334 = vmatpush1.bf16.msra.mxu0 0
      %335 = vmatprep.subr.bf16.mxu0 0
      %336 = vmatpush1.bf16.msra.mxu0 0
      %337 = vmatprep.subr.bf16.mxu0 0
      %338 = vmatpush1.bf16.msra.mxu0 0
      %339 = vmatprep.subr.bf16.mxu0 0
      %340 = vmatpush1.bf16.msra.mxu0 0
      %341 = vmatprep.mubr.bf16.mxu0 0
      %342 = vmatmul.mubr.bf16.gmra.mrb[0].mxu0 %v297
      %v343 = vpop.f32.mrb[0].mxu0
      %v344 = vadd.f32 0.0, %v343
      %v345 = vpop.f32.mrb[0].mxu0
      %v346 = vadd.f32 0.0, %v345
      %v347 = vpop.f32.mrb[0].mxu0
      %v348 = vadd.f32 0.0, %v347
      %v349 = vpop.f32.mrb[0].mxu0
      %v350 = vadd.f32 0.0, %v349
      %351 = vmatprep.mubr.bf16.mxu0 0
      %352 = vmatmul.mubr.bf16.gmra.mrb[0].mxu0 %v300
      %v353 = vpop.f32.mrb[0].mxu0
      %v354 = vadd.f32 0.0, %v353
      %v355 = vpop.f32.mrb[0].mxu0
      %v356 = vadd.f32 0.0, %v355
      %v357 = vpop.f32.mrb[0].mxu0
      %v358 = vpop.f32.mrb[0].mxu0
      %359 = vdwg.mxu0
      %v360 = vmax.f32 %v344, 0.0
      %v361 = vmax.f32 %v346, 0.0
      %v362 = vmax.f32 %v348, 0.0
      %v363 = vmax.f32 %v350, 0.0
      %v364 = vmax.f32 %v354, 0.0
      %v365 = vmax.f32 %v356, 0.0
      %v366 = vmin.f32 %v360, 6.0
      %v367 = vmin.f32 %v361, 6.0
      %v368 = vmin.f32 %v362, 6.0
      %v369 = vmin.f32 %v363, 6.0
      %v370 = vmin.f32 %v364, 6.0
      %v371 = vmin.f32 %v365, 6.0
      %v372 = vld [vmem:[%s2] sm:$0xff]
      %v373 = vld [vmem:[%s2 + $0x8] sm:$0xff]
      %v374 = vld [vmem:[%s2 + $0x10] sm:$0xff]
      %v375 = vld [vmem:[%s2 + $0x18] sm:$0xff]
      %v376 = vld [vmem:[%s2 + $0x20] sm:$0xff]
      %v377 = vld [vmem:[%s2 + $0x28] sm:$0xff]
      %v378 = vld [vmem:[%s2 + $0x30] sm:$0xff]
      %v379 = vld [vmem:[%s2 + $0x38] sm:$0xff]
      %v380 = vld [vmem:[%s2 + $0x40] sm:$0xff]
      %v381 = vld [vmem:[%s2 + $0x48] sm:$0xff]
      %v382 = vld [vmem:[%s2 + $0x50] sm:$0xff]
      %v383 = vld [vmem:[%s2 + $0x58] sm:$0xff]
      %v384 = vld [vmem:[%s2 + $0x60] sm:$0xff]
      %v385 = vld [vmem:[%s2 + $0x68] sm:$0xff]
      %v386 = vld [vmem:[%s2 + $0x70] sm:$0xff]
      %v387 = vld [vmem:[%s2 + $0x78] sm:$0xff]
      %v388 = vld [vmem:[%s2 + $0x80] sm:$0xff]
      %v389 = vld [vmem:[%s2 + $0x88] sm:$0xff]
      %v390 = vld [vmem:[%s2 + $0x90] sm:$0xff]
      %v391 = vld [vmem:[%s2 + $0x98] sm:$0xff]
      %v392 = vld [vmem:[%s2 + $0xa0] sm:$0xff]
      %v393 = vld [vmem:[%s2 + $0xa8] sm:$0xff]
      %v394 = vld [vmem:[%s2 + $0xb0] sm:$0xff]
      %v395 = vld [vmem:[%s2 + $0xb8] sm:$0xff]
      %v396 = vld [vmem:[%s2 + $0xc0] sm:$0xff]
      %v397 = vld [vmem:[%s2 + $0xc8] sm:$0xff]
      %v398 = vld [vmem:[%s2 + $0xd0] sm:$0xff]
      %v399 = vld [vmem:[%s6] sm:$0xff]
      %v400 = vld [vmem:[%s6 + $0x8] sm:$0xff]
      %402 = vset.pattern.permute.xlu0 0
      %403 = vperm.xlu0 %402, %v384
      %v404 = vpop.permute.xlu0 %403
      %407 = vset.pattern.permute.xlu0 0
      %408 = vperm.xlu0 %407, %v385
      %v409 = vpop.permute.xlu0 %408
      %412 = vset.pattern.permute.xlu0 0
      %413 = vperm.xlu0 %412, %v386
      %v414 = vpop.permute.xlu0 %413
      %v416 = vmul.f32 %v366, %v404
      %v417 = vmul.f32 %v367, %v404
      %v418 = vmul.f32 %v368, %v409
      %v419 = vmul.f32 %v369, %v409
      %v420 = vmul.f32 %v370, %v414
      %v421 = vmul.f32 %v371, %v414
      %422 = vrot.lane.b32.xlu0 %v366, 17
      %v423 = vpop.permute.xlu0 %422
      %424 = vrot.lane.b32.xlu0 %v368, 17
      %v425 = vpop.permute.xlu0 %424
      %426 = vrot.lane.b32.xlu0 %v370, 17
      %v427 = vpop.permute.xlu0 %426
      %428 = vrot.lane.b32.xlu0 %v367, 17
      %v429 = vpop.permute.xlu0 %428
      %430 = vrot.lane.b32.xlu0 %v369, 17
      %v431 = vpop.permute.xlu0 %430
      %432 = vrot.lane.b32.xlu0 %v371, 17
      %v433 = vpop.permute.xlu0 %432
      %v434 = vlaneseq
      %v435 = vand.u32 %v434, 127
      %vm436 = vcmp.lt.s32.totalorder %v435, 17
      %v437 = vsel %vm436, %v423, %v429
      %v438 = vsel %vm436, %v425, %v431
      %v439 = vsel %vm436, %v427, %v433
      %v440 = vsel %vm436, %v429, %v423
      %v441 = vsel %vm436, %v431, %v425
      %v442 = vsel %vm436, %v433, %v427
      %444 = vset.pattern.permute.xlu0 0
      %445 = vperm.xlu0 %444, %v372
      %v446 = vpop.permute.xlu0 %445
      %449 = vset.pattern.permute.xlu0 0
      %450 = vperm.xlu0 %449, %v373
      %v451 = vpop.permute.xlu0 %450
      %454 = vset.pattern.permute.xlu0 0
      %455 = vperm.xlu0 %454, %v374
      %v456 = vpop.permute.xlu0 %455
      %v458 = vmul.f32 %v440, %v446
      %v459 = vmul.f32 %v437, %v446
      %v460 = vmul.f32 %v441, %v451
      %v461 = vmul.f32 %v438, %v451
      %v462 = vmul.f32 %v442, %v456
      %v463 = vmul.f32 %v439, %v456
      %v464 = vlaneseq
      %v465 = vshrl.u32 %v464, 7
      %v466 = vsub.s32 0, %v465
      %v467 = vrot.slane %v399, %v466
      %v468 = vlaneseq
      %v469 = vshrl.u32 %v468, 7
      %v470 = vsub.s32 0, %v469
      %v471 = vrot.slane %v400, %v470
      %v472 = vmul.f32 %v458, %v467
      %v473 = vmul.f32 %v459, %v471
      %v474 = vmul.f32 %v460, %v467
      %v475 = vmul.f32 %v461, %v471
      %v476 = vmul.f32 %v462, %v467
      %v477 = vmul.f32 %v463, %v471
      %v478 = vadd.f32 %v416, %v472
      %v479 = vadd.f32 %v417, %v473
      %v480 = vadd.f32 %v418, %v474
      %v481 = vadd.f32 %v419, %v475
      %v482 = vadd.f32 %v420, %v476
      %v483 = vadd.f32 %v421, %v477
      %484 = vrot.lane.b32.xlu0 %v366, 16
      %v485 = vpop.permute.xlu0 %484
      %486 = vrot.lane.b32.xlu0 %v368, 16
      %v487 = vpop.permute.xlu0 %486
      %488 = vrot.lane.b32.xlu0 %v370, 16
      %v489 = vpop.permute.xlu0 %488
      %490 = vrot.lane.b32.xlu0 %v367, 16
      %v491 = vpop.permute.xlu0 %490
      %492 = vrot.lane.b32.xlu0 %v369, 16
      %v493 = vpop.permute.xlu0 %492
      %494 = vrot.lane.b32.xlu0 %v371, 16
      %v495 = vpop.permute.xlu0 %494
      %vm496 = vcmp.lt.s32.totalorder %v435, 16
      %v497 = vsel %vm496, %v485, %v491
      %v498 = vsel %vm496, %v487, %v493
      %v499 = vsel %vm496, %v489, %v495
      %v500 = vsel %vm496, %v491, %v485
      %v501 = vsel %vm496, %v493, %v487
      %v502 = vsel %vm496, %v495, %v489
      %504 = vset.pattern.permute.xlu0 0
      %505 = vperm.xlu0 %504, %v375
      %v506 = vpop.permute.xlu0 %505
      %509 = vset.pattern.permute.xlu0 0
      %510 = vperm.xlu0 %509, %v376
      %v511 = vpop.permute.xlu0 %510
      %514 = vset.pattern.permute.xlu0 0
      %515 = vperm.xlu0 %514, %v377
      %v516 = vpop.permute.xlu0 %515
      %v518 = vmul.f32 %v500, %v506
      %v519 = vmul.f32 %v497, %v506
      %v520 = vmul.f32 %v501, %v511
      %v521 = vmul.f32 %v498, %v511
      %v522 = vmul.f32 %v502, %v516
      %v523 = vmul.f32 %v499, %v516
      %v524 = vlaneseq
      %v525 = vshrl.u32 %v524, 7
      %v526 = vsub.s32 1, %v525
      %v527 = vrot.slane %v399, %v526
      %v528 = vlaneseq
      %v529 = vshrl.u32 %v528, 7
      %v530 = vsub.s32 1, %v529
      %v531 = vrot.slane %v400, %v530
      %v532 = vmul.f32 %v518, %v527
      %v533 = vmul.f32 %v519, %v531
      %v534 = vmul.f32 %v520, %v527
      %v535 = vmul.f32 %v521, %v531
      %v536 = vmul.f32 %v522, %v527
      %v537 = vmul.f32 %v523, %v531
      %v538 = vadd.f32 %v478, %v532
      %v539 = vadd.f32 %v479, %v533
      %v540 = vadd.f32 %v480, %v534
      %v541 = vadd.f32 %v481, %v535
      %v542 = vadd.f32 %v482, %v536
      %v543 = vadd.f32 %v483, %v537
      %544 = vrot.lane.b32.xlu0 %v366, 15
      %v545 = vpop.permute.xlu0 %544
      %546 = vrot.lane.b32.xlu0 %v368, 15
      %v547 = vpop.permute.xlu0 %546
      %548 = vrot.lane.b32.xlu0 %v370, 15
      %v549 = vpop.permute.xlu0 %548
      %550 = vrot.lane.b32.xlu0 %v367, 15
      %v551 = vpop.permute.xlu0 %550
      %552 = vrot.lane.b32.xlu0 %v369, 15
      %v553 = vpop.permute.xlu0 %552
      %554 = vrot.lane.b32.xlu0 %v371, 15
      %v555 = vpop.permute.xlu0 %554
      %vm556 = vcmp.lt.s32.totalorder %v435, 15
      %v557 = vsel %vm556, %v545, %v551
      %v558 = vsel %vm556, %v547, %v553
      %v559 = vsel %vm556, %v549, %v555
      %v560 = vsel %vm556, %v551, %v545
      %v561 = vsel %vm556, %v553, %v547
      %v562 = vsel %vm556, %v555, %v549
      %564 = vset.pattern.permute.xlu0 0
      %565 = vperm.xlu0 %564, %v378
      %v566 = vpop.permute.xlu0 %565
      %569 = vset.pattern.permute.xlu0 0
      %570 = vperm.xlu0 %569, %v379
      %v571 = vpop.permute.xlu0 %570
      %574 = vset.pattern.permute.xlu0 0
      %575 = vperm.xlu0 %574, %v380
      %v576 = vpop.permute.xlu0 %575
      %v578 = vmul.f32 %v560, %v566
      %v579 = vmul.f32 %v557, %v566
      %v580 = vmul.f32 %v561, %v571
      %v581 = vmul.f32 %v558, %v571
      %v582 = vmul.f32 %v562, %v576
      %v583 = vmul.f32 %v559, %v576
      %v584 = vlaneseq
      %v585 = vshrl.u32 %v584, 7
      %v586 = vsub.s32 2, %v585
      %v587 = vrot.slane %v399, %v586
      %v588 = vlaneseq
      %v589 = vshrl.u32 %v588, 7
      %v590 = vsub.s32 2, %v589
      %v591 = vrot.slane %v400, %v590
      %v592 = vmul.f32 %v578, %v587
      %v593 = vmul.f32 %v579, %v591
      %v594 = vmul.f32 %v580, %v587
      %v595 = vmul.f32 %v581, %v591
      %v596 = vmul.f32 %v582, %v587
      %v597 = vmul.f32 %v583, %v591
      %v598 = vadd.f32 %v538, %v592
      %v599 = vadd.f32 %v539, %v593
      %v600 = vadd.f32 %v540, %v594
      %v601 = vadd.f32 %v541, %v595
      %v602 = vadd.f32 %v542, %v596
      %v603 = vadd.f32 %v543, %v597
      %604 = vrot.lane.b32.xlu0 %v366, 1
      %v605 = vpop.permute.xlu0 %604
      %606 = vrot.lane.b32.xlu0 %v368, 1
      %v607 = vpop.permute.xlu0 %606
      %608 = vrot.lane.b32.xlu0 %v370, 1
      %v609 = vpop.permute.xlu0 %608
      %610 = vrot.lane.b32.xlu0 %v367, 1
      %v611 = vpop.permute.xlu0 %610
      %612 = vrot.lane.b32.xlu0 %v369, 1
      %v613 = vpop.permute.xlu0 %612
      %614 = vrot.lane.b32.xlu0 %v371, 1
      %v615 = vpop.permute.xlu0 %614
      %vm616 = vcmp.lt.s32.totalorder %v435, 1
      %v617 = vsel %vm616, %v605, %v611
      %v618 = vsel %vm616, %v607, %v613
      %v619 = vsel %vm616, %v609, %v615
      %v620 = vsel %vm616, %v611, %v605
      %v621 = vsel %vm616, %v613, %v607
      %v622 = vsel %vm616, %v615, %v609
      %624 = vset.pattern.permute.xlu0 0
      %625 = vperm.xlu0 %624, %v381
      %v626 = vpop.permute.xlu0 %625
      %629 = vset.pattern.permute.xlu0 0
      %630 = vperm.xlu0 %629, %v382
      %v631 = vpop.permute.xlu0 %630
      %634 = vset.pattern.permute.xlu0 0
      %635 = vperm.xlu0 %634, %v383
      %v636 = vpop.permute.xlu0 %635
      %v638 = vmul.f32 %v620, %v626
      %v639 = vmul.f32 %v617, %v626
      %v640 = vmul.f32 %v621, %v631
      %v641 = vmul.f32 %v618, %v631
      %v642 = vmul.f32 %v622, %v636
      %v643 = vmul.f32 %v619, %v636
      %v644 = vlaneseq
      %v645 = vshrl.u32 %v644, 7
      %v646 = vsub.s32 3, %v645
      %v647 = vrot.slane %v399, %v646
      %v648 = vlaneseq
      %v649 = vshrl.u32 %v648, 7
      %v650 = vsub.s32 3, %v649
      %v651 = vrot.slane %v400, %v650
      %v652 = vmul.f32 %v638, %v647
      %v653 = vmul.f32 %v639, %v651
      %v654 = vmul.f32 %v640, %v647
      %v655 = vmul.f32 %v641, %v651
      %v656 = vmul.f32 %v642, %v647
      %v657 = vmul.f32 %v643, %v651
      %v658 = vadd.f32 %v598, %v652
      %v659 = vadd.f32 %v599, %v653
      %v660 = vadd.f32 %v600, %v654
      %v661 = vadd.f32 %v601, %v655
      %v662 = vadd.f32 %v602, %v656
      %v663 = vadd.f32 %v603, %v657
      %664 = vrot.lane.b32.xlu0 %v366, 127
      %v665 = vpop.permute.xlu0 %664
      %666 = vrot.lane.b32.xlu0 %v368, 127
      %v667 = vpop.permute.xlu0 %666
      %668 = vrot.lane.b32.xlu0 %v370, 127
      %v669 = vpop.permute.xlu0 %668
      %670 = vrot.lane.b32.xlu0 %v367, 127
      %v671 = vpop.permute.xlu0 %670
      %672 = vrot.lane.b32.xlu0 %v369, 127
      %v673 = vpop.permute.xlu0 %672
      %674 = vrot.lane.b32.xlu0 %v371, 127
      %v675 = vpop.permute.xlu0 %674
      %vm676 = vcmp.lt.s32.totalorder %v435, 127
      %v677 = vsel %vm676, %v665, %v671
      %v678 = vsel %vm676, %v667, %v673
      %v679 = vsel %vm676, %v669, %v675
      %v680 = vsel %vm676, %v671, %v665
      %v681 = vsel %vm676, %v673, %v667
      %v682 = vsel %vm676, %v675, %v669
      %684 = vset.pattern.permute.xlu0 0
      %685 = vperm.xlu0 %684, %v387
      %v686 = vpop.permute.xlu0 %685
      %689 = vset.pattern.permute.xlu0 0
      %690 = vperm.xlu0 %689, %v388
      %v691 = vpop.permute.xlu0 %690
      %694 = vset.pattern.permute.xlu0 0
      %695 = vperm.xlu0 %694, %v389
      %v696 = vpop.permute.xlu0 %695
      %v698 = vmul.f32 %v677, %v686
      %v699 = vmul.f32 %v680, %v686
      %v700 = vmul.f32 %v678, %v691
      %v701 = vmul.f32 %v681, %v691
      %v702 = vmul.f32 %v679, %v696
      %v703 = vmul.f32 %v682, %v696
      %v704 = vlaneseq
      %v705 = vshrl.u32 %v704, 7
      %v706 = vsub.s32 4, %v705
      %v707 = vrot.slane %v399, %v706
      %v708 = vlaneseq
      %v709 = vshrl.u32 %v708, 7
      %v710 = vsub.s32 4, %v709
      %v711 = vrot.slane %v400, %v710
      %v712 = vmul.f32 %v698, %v707
      %v713 = vmul.f32 %v699, %v711
      %v714 = vmul.f32 %v700, %v707
      %v715 = vmul.f32 %v701, %v711
      %v716 = vmul.f32 %v702, %v707
      %v717 = vmul.f32 %v703, %v711
      %v718 = vadd.f32 %v658, %v712
      %v719 = vadd.f32 %v659, %v713
      %v720 = vadd.f32 %v660, %v714
      %v721 = vadd.f32 %v661, %v715
      %v722 = vadd.f32 %v662, %v716
      %v723 = vadd.f32 %v663, %v717
      %724 = vrot.lane.b32.xlu0 %v366, 113
      %v725 = vpop.permute.xlu0 %724
      %726 = vrot.lane.b32.xlu0 %v368, 113
      %v727 = vpop.permute.xlu0 %726
      %728 = vrot.lane.b32.xlu0 %v370, 113
      %v729 = vpop.permute.xlu0 %728
      %730 = vrot.lane.b32.xlu0 %v367, 113
      %v731 = vpop.permute.xlu0 %730
      %732 = vrot.lane.b32.xlu0 %v369, 113
      %v733 = vpop.permute.xlu0 %732
      %734 = vrot.lane.b32.xlu0 %v371, 113
      %v735 = vpop.permute.xlu0 %734
      %vm736 = vcmp.lt.s32.totalorder %v435, 113
      %v737 = vsel %vm736, %v725, %v731
      %v738 = vsel %vm736, %v727, %v733
      %v739 = vsel %vm736, %v729, %v735
      %v740 = vsel %vm736, %v731, %v725
      %v741 = vsel %vm736, %v733, %v727
      %v742 = vsel %vm736, %v735, %v729
      %744 = vset.pattern.permute.xlu0 0
      %745 = vperm.xlu0 %744, %v390
      %v746 = vpop.permute.xlu0 %745
      %749 = vset.pattern.permute.xlu0 0
      %750 = vperm.xlu0 %749, %v391
      %v751 = vpop.permute.xlu0 %750
      %754 = vset.pattern.permute.xlu0 0
      %755 = vperm.xlu0 %754, %v392
      %v756 = vpop.permute.xlu0 %755
      %v758 = vmul.f32 %v737, %v746
      %v759 = vmul.f32 %v740, %v746
      %v760 = vmul.f32 %v738, %v751
      %v761 = vmul.f32 %v741, %v751
      %v762 = vmul.f32 %v739, %v756
      %v763 = vmul.f32 %v742, %v756
      %v764 = vlaneseq
      %v765 = vshrl.u32 %v764, 7
      %v766 = vsub.s32 5, %v765
      %v767 = vrot.slane %v399, %v766
      %v768 = vlaneseq
      %v769 = vshrl.u32 %v768, 7
      %v770 = vsub.s32 5, %v769
      %v771 = vrot.slane %v400, %v770
      %v772 = vmul.f32 %v758, %v767
      %v773 = vmul.f32 %v759, %v771
      %v774 = vmul.f32 %v760, %v767
      %v775 = vmul.f32 %v761, %v771
      %v776 = vmul.f32 %v762, %v767
      %v777 = vmul.f32 %v763, %v771
      %v778 = vadd.f32 %v718, %v772
      %v779 = vadd.f32 %v719, %v773
      %v780 = vadd.f32 %v720, %v774
      %v781 = vadd.f32 %v721, %v775
      %v782 = vadd.f32 %v722, %v776
      %v783 = vadd.f32 %v723, %v777
      %784 = vrot.lane.b32.xlu0 %v366, 112
      %v785 = vpop.permute.xlu0 %784
      %786 = vrot.lane.b32.xlu0 %v368, 112
      %v787 = vpop.permute.xlu0 %786
      %788 = vrot.lane.b32.xlu0 %v370, 112
      %v789 = vpop.permute.xlu0 %788
      %790 = vrot.lane.b32.xlu0 %v367, 112
      %v791 = vpop.permute.xlu0 %790
      %792 = vrot.lane.b32.xlu0 %v369, 112
      %v793 = vpop.permute.xlu0 %792
      %794 = vrot.lane.b32.xlu0 %v371, 112
      %v795 = vpop.permute.xlu0 %794
      %vm796 = vcmp.lt.s32.totalorder %v435, 112
      %v797 = vsel %vm796, %v785, %v791
      %v798 = vsel %vm796, %v787, %v793
      %v799 = vsel %vm796, %v789, %v795
      %v800 = vsel %vm796, %v791, %v785
      %v801 = vsel %vm796, %v793, %v787
      %v802 = vsel %vm796, %v795, %v789
      %804 = vset.pattern.permute.xlu0 0
      %805 = vperm.xlu0 %804, %v393
      %v806 = vpop.permute.xlu0 %805
      %809 = vset.pattern.permute.xlu0 0
      %810 = vperm.xlu0 %809, %v394
      %v811 = vpop.permute.xlu0 %810
      %814 = vset.pattern.permute.xlu0 0
      %815 = vperm.xlu0 %814, %v395
      %v816 = vpop.permute.xlu0 %815
      %v818 = vmul.f32 %v797, %v806
      %v819 = vmul.f32 %v800, %v806
      %v820 = vmul.f32 %v798, %v811
      %v821 = vmul.f32 %v801, %v811
      %v822 = vmul.f32 %v799, %v816
      %v823 = vmul.f32 %v802, %v816
      %v824 = vlaneseq
      %v825 = vshrl.u32 %v824, 7
      %v826 = vsub.s32 6, %v825
      %v827 = vrot.slane %v399, %v826
      %v828 = vlaneseq
      %v829 = vshrl.u32 %v828, 7
      %v830 = vsub.s32 6, %v829
      %v831 = vrot.slane %v400, %v830
      %v832 = vmul.f32 %v818, %v827
      %v833 = vmul.f32 %v819, %v831
      %v834 = vmul.f32 %v820, %v827
      %v835 = vmul.f32 %v821, %v831
      %v836 = vmul.f32 %v822, %v827
      %v837 = vmul.f32 %v823, %v831
      %v838 = vadd.f32 %v778, %v832
      %v839 = vadd.f32 %v779, %v833
      %v840 = vadd.f32 %v780, %v834
      %v841 = vadd.f32 %v781, %v835
      %v842 = vadd.f32 %v782, %v836
      %v843 = vadd.f32 %v783, %v837
      %844 = vrot.lane.b32.xlu0 %v366, 111
      %v845 = vpop.permute.xlu0 %844
      %846 = vrot.lane.b32.xlu0 %v368, 111
      %v847 = vpop.permute.xlu0 %846
      %848 = vrot.lane.b32.xlu0 %v370, 111
      %v849 = vpop.permute.xlu0 %848
      %850 = vrot.lane.b32.xlu0 %v367, 111
      %v851 = vpop.permute.xlu0 %850
      %852 = vrot.lane.b32.xlu0 %v369, 111
      %v853 = vpop.permute.xlu0 %852
      %854 = vrot.lane.b32.xlu0 %v371, 111
      %v855 = vpop.permute.xlu0 %854
      %vm856 = vcmp.lt.s32.totalorder %v435, 111
      %v857 = vsel %vm856, %v845, %v851
      %v858 = vsel %vm856, %v847, %v853
      %v859 = vsel %vm856, %v849, %v855
      %v860 = vsel %vm856, %v851, %v845
      %v861 = vsel %vm856, %v853, %v847
      %v862 = vsel %vm856, %v855, %v849
      %864 = vset.pattern.permute.xlu0 0
      %865 = vperm.xlu0 %864, %v396
      %v866 = vpop.permute.xlu0 %865
      %869 = vset.pattern.permute.xlu0 0
      %870 = vperm.xlu0 %869, %v397
      %v871 = vpop.permute.xlu0 %870
      %874 = vset.pattern.permute.xlu0 0
      %875 = vperm.xlu0 %874, %v398
      %v876 = vpop.permute.xlu0 %875
      %v878 = vmul.f32 %v857, %v866
      %v879 = vmul.f32 %v860, %v866
      %v880 = vmul.f32 %v858, %v871
      %v881 = vmul.f32 %v861, %v871
      %v882 = vmul.f32 %v859, %v876
      %v883 = vmul.f32 %v862, %v876
      %v884 = vlaneseq
      %v885 = vshrl.u32 %v884, 7
      %v886 = vsub.s32 7, %v885
      %v887 = vrot.slane %v399, %v886
      %v888 = vlaneseq
      %v889 = vshrl.u32 %v888, 7
      %v890 = vsub.s32 7, %v889
      %v891 = vrot.slane %v400, %v890
      %v892 = vmul.f32 %v878, %v887
      %v893 = vmul.f32 %v879, %v891
      %v894 = vmul.f32 %v880, %v887
      %v895 = vmul.f32 %v881, %v891
      %v896 = vmul.f32 %v882, %v887
      %v897 = vmul.f32 %v883, %v891
      %v898 = vadd.f32 %v838, %v892
      %v899 = vadd.f32 %v839, %v893
      %v900 = vadd.f32 %v840, %v894
      %v901 = vadd.f32 %v841, %v895
      %v902 = vadd.f32 %v842, %v896
      %v903 = vadd.f32 %v843, %v897
      %v904 = vld [vmem:[%s3] sm:$0xff]
      %v905 = vld [vmem:[%s3 + $0x8] sm:$0xff]
      %v906 = vld [vmem:[%s3 + $0x10] sm:$0xff]
      %908 = vset.pattern.permute.xlu0 0
      %909 = vperm.xlu0 %908, %v904
      %v910 = vpop.permute.xlu0 %909
      %913 = vset.pattern.permute.xlu0 0
      %914 = vperm.xlu0 %913, %v905
      %v915 = vpop.permute.xlu0 %914
      %918 = vset.pattern.permute.xlu0 0
      %919 = vperm.xlu0 %918, %v906
      %v920 = vpop.permute.xlu0 %919
      %v922 = vadd.f32 %v898, %v910
      %v923 = vadd.f32 %v899, %v910
      %v924 = vadd.f32 %v900, %v915
      %v925 = vadd.f32 %v901, %v915
      %v926 = vadd.f32 %v902, %v920
      %v927 = vadd.f32 %v903, %v920
      %v928 = vmax.f32 %v922, 0.0
      %v929 = vmax.f32 %v923, 0.0
      %v930 = vmax.f32 %v924, 0.0
      %v931 = vmax.f32 %v925, 0.0
      %v932 = vmax.f32 %v926, 0.0
      %v933 = vmax.f32 %v927, 0.0
      %v934 = vmin.f32 %v928, 6.0
      %v935 = vmin.f32 %v929, 6.0
      %v936 = vmin.f32 %v930, 6.0
      %v937 = vmin.f32 %v931, 6.0
      %v938 = vmin.f32 %v932, 6.0
      %v939 = vmin.f32 %v933, 6.0
      %v940 = vld [vmem:[%s4] sm:$0xf]
      %v941 = vpack.c.bf16 %v936, %v934
      %v942 = vpack.c.bf16 %v937, %v935
      %v943 = vpack.c.bf16 %v938, %v938
      %v944 = vpack.c.bf16 %v939, %v939
      %v945 = vld [vmem:[%s5] sm:$0xff]
      %947 = vset.pattern.permute.xlu0 0
      %948 = vperm.xlu0 %947, %v945
      %v949 = vpop.permute.xlu0 %948
      %vm951 = vcmask 195584
      %v953 = vsel %vm951, %v940, 0
      %v956 = vsel %vm302, %v943, 0
      %v959 = vsel %vm302, %v944, 0
      %961 = vmatprep.subr.bf16.mxu0 %v942
      %962 = vmatpush1.bf16.msra.mxu0 %v941
      %963 = vmatprep.subr.bf16.mxu0 %v959
      %964 = vmatpush1.bf16.msra.mxu0 %v956
      %965 = vmatprep.subr.bf16.mxu0 0
      %966 = vmatpush1.bf16.msra.mxu0 0
      %967 = vmatprep.subr.bf16.mxu0 0
      %968 = vmatpush1.bf16.msra.mxu0 0
      %969 = vmatprep.subr.bf16.mxu0 0
      %970 = vmatpush1.bf16.msra.mxu0 0
      %971 = vmatprep.subr.bf16.mxu0 0
      %972 = vmatpush1.bf16.msra.mxu0 0
      %973 = vmatprep.subr.bf16.mxu0 0
      %974 = vmatpush1.bf16.msra.mxu0 0
      %975 = vmatprep.subr.bf16.mxu0 0
      %976 = vmatpush1.bf16.msra.mxu0 0
      %977 = vmatprep.subr.bf16.mxu0 0
      %978 = vmatpush1.bf16.msra.mxu0 0
      %979 = vmatprep.subr.bf16.mxu0 0
      %980 = vmatpush1.bf16.msra.mxu0 0
      %981 = vmatprep.subr.bf16.mxu0 0
      %982 = vmatpush1.bf16.msra.mxu0 0
      %983 = vmatprep.subr.bf16.mxu0 0
      %984 = vmatpush1.bf16.msra.mxu0 0
      %985 = vmatprep.subr.bf16.mxu0 0
      %986 = vmatpush1.bf16.msra.mxu0 0
      %987 = vmatprep.subr.bf16.mxu0 0
      %988 = vmatpush1.bf16.msra.mxu0 0
      %989 = vmatprep.subr.bf16.mxu0 0
      %990 = vmatpush1.bf16.msra.mxu0 0
      %991 = vmatprep.subr.bf16.mxu0 0
      %992 = vmatpush1.bf16.msra.mxu0 0
      %993 = vmatprep.mubr.bf16.mxu0 0
      %994 = vmatmul.mubr.bf16.gmra.mrb[0].mxu0 %v953
      %v995 = vpop.f32.mrb[0].mxu0
      %v996 = vadd.f32 %v949, %v995
      %v997 = vpop.f32.mrb[0].mxu0
      %v998 = vadd.f32 %v949, %v997
      %v999 = vpop.f32.mrb[0].mxu0
      %v1000 = vpop.f32.mrb[0].mxu0
      %1001 = vdwg.mxu0
      %v1002 = vadd.f32 %v996, %v280
      %v1003 = vadd.f32 %v998, %v281
      %1004 = vst [vmem:[%s278] sm:$0xff] %v1002
      %1005 = vst [vmem:[%s278 + $0x8] sm:$0xff] %v1003
      %p1006 = scmp.lt.s32.totalorder %s18, 1
      %s1007 = scalar_select %p1006, %s18, 1
      %s1008 = smul.addr %s1007, 2
      %s1009 = smul.addr %s1008, 8
      %s1010 = scalar_lea.vmem %s7, %s1009
      // Predicated region
      $region49: #{inverted_residual_forward.1} parent=47 // pred_check
        %p1011 = pneg %p188
      $region50: #{inverted_residual_forward.1} parent=47 // pred_check_branch
        %1013 = sbr.rel (%p1011) target = $region52
      $region51: #{inverted_residual_forward.1} parent=47 // pred_region
        _
      $region52: #{inverted_residual_forward.1} parent=47 // pred_fallthru
        _
    $region48: #{inverted_residual_forward.1} parent=5 // pred_fallthru
      _
    %p1014 = scmp.le.s32.totalorder 2, %s13
    // Predicated region
    $region53: #{inverted_residual_forward.1} parent=5 // pred_check
      %p1015 = pneg %p1014
    $region54: #{inverted_residual_forward.1} parent=5 // pred_check_branch
      %1017 = sbr.rel (%p1015) target = $region56
    $region55: #{inverted_residual_forward.1} parent=5 // pred_region
      %s1018 = ssub.s32 %s13, 2
      // Predicated region
      $region57: #{inverted_residual_forward.1} parent=55 // pred_check
        %p1019 = pneg %p194
      $region58: #{inverted_residual_forward.1} parent=55 // pred_check_branch
        %1021 = sbr.rel (%p1019) target = $region60
      $region59: #{inverted_residual_forward.1} parent=55 // pred_region
        %p1022 = scmp.lt.s32.totalorder %s19, 1
        %s1023 = scalar_select %p1022, %s19, 1
        %s1024 = smul.addr %s1023, 2
        %s1025 = smul.addr %s1024, 8
        %s1026 = scalar_lea.vmem %s7, %s1025
      $region60: #{inverted_residual_forward.1} parent=55 // pred_fallthru
        _
    $region56: #{inverted_residual_forward.1} parent=5 // pred_fallthru
      _
  $region6: #{inverted_residual_forward.1} parent=0 // loop_footer
    %s17 = sadd.s32 1, %s13
  $region7: #{inverted_residual_forward.1} parent=0 // loop_footer_branch
    %12 = sbr.rel target = $region3
  $region8: #{inverted_residual_forward.1} parent=0 // loop_exit
    _

</llo_original>
